<compile_context>
chip_gen: v7x
topology: tpu7x:2x2x1
jax: 0.10.0
libtpu: 0.0.40
codegen_flags: <defaults>
</compile_context>

<pallas_src>
import jax
import jax.numpy as jnp
from jax.experimental import pallas as pl
from jax.experimental.pallas import tpu as pltpu


def _copy_kernel(x_ref, o_ref):
    # Input and output blocks share the same sequence offset (block index l),
    # so a straight tile copy implements the chomp; rows >= L_out only appear
    # in the dropped out-of-bounds part of the last partial output block.
    o_ref[...] = x_ref[...]


def _slice_kernel(x_ref, o_ref):
    # Fallback for tiny L_out: whole-sequence block in, statically sliced out.
    o_ref[...] = x_ref[:, : o_ref.shape[1], :]


def _round_down(a, b):
    return (a // b) * b


_VMEM_LIMIT_BYTES = 32 * 1024 * 1024  # explicit scoped-VMEM budget, portable v5e/v6e/v7x


def chomp1d(x, chomp_size, *, tile_l=None):
    """Pallas equivalent of Chomp1d: x[:, :-chomp_size, :] for x of shape (B, L, C)."""
    assert x.ndim == 3, "expected (B, L, C) input"
    B, L, C = x.shape
    assert 0 < chomp_size < L, "chomp_size must be in (0, L)"
    L_out = L - chomp_size

    dtype_bytes = jnp.dtype(x.dtype).itemsize
    sublane = {4: 8, 2: 16, 1: 32}.get(dtype_bytes, 8)
    out_shape = jax.ShapeDtypeStruct((B, L_out, C), x.dtype)

    if L_out < sublane:
        # Degenerate case: L_out smaller than the sublane packing. Use full-L /
        # full-L_out blocks (block dims == full array dims keep tiling legal).
        return pl.pallas_call(
            _slice_kernel,
            out_shape=out_shape,
            grid_spec=pltpu.PrefetchScalarGridSpec(
                num_scalar_prefetch=0,
                grid=(B,),
                in_specs=[pl.BlockSpec((1, L, C), lambda b: (b, 0, 0))],
                out_specs=pl.BlockSpec((1, L_out, C), lambda b: (b, 0, 0)),
            ),
            compiler_params=pltpu.CompilerParams(
                dimension_semantics=("parallel",),
                vmem_limit_bytes=_VMEM_LIMIT_BYTES,
            ),
        )(x)

    if tile_l is None:
        # ~4 MiB per (1, tile_l, C) block: large enough to hit HBM roofline,
        # small enough that 2x-double-buffered in+out blocks (~16 MiB total)
        # fit every generation's VMEM (including v7x's 64 MiB).
        target_block_bytes = 4 * 1024 * 1024
        rows = max(sublane, target_block_bytes // max(1, C * dtype_bytes))
        tile_l = max(sublane, _round_down(rows, sublane))
    # Keep tile_l a multiple of the sublane packing and no larger than needed.
    tile_l = max(sublane, min(tile_l, _round_down(L_out, sublane)))

    grid = (B, pl.cdiv(L_out, tile_l))

    return pl.pallas_call(
        _copy_kernel,
        out_shape=out_shape,
        grid_spec=pltpu.PrefetchScalarGridSpec(
            num_scalar_prefetch=0,
            grid=grid,
            in_specs=[pl.BlockSpec((1, tile_l, C), lambda b, l: (b, l, 0))],
            out_specs=pl.BlockSpec((1, tile_l, C), lambda b, l: (b, l, 0)),
        ),
        compiler_params=pltpu.CompilerParams(
            # Pure copy: every grid point is independent -> both axes parallel
            # (lets Mosaic shard across v7x's 2 TensorCores; neutral on v5e/v6e).
            dimension_semantics=("parallel", "parallel"),
            vmem_limit_bytes=_VMEM_LIMIT_BYTES,
        ),
    )(x)


if __name__ == "__main__":
    key = jax.random.PRNGKey(0)
    k0, k1, k2 = jax.random.split(key, 3)

    # Main case: (B, L, C) = (2, 16, 128), chomp 3 -> (2, 13, 128); exercises a
    # partial last sequence tile (13 not a multiple of 8).
    x = jax.random.normal(k0, (2, 16, 128), dtype=jnp.float32)
    out = jax.block_until_ready(chomp1d(x, 3))
    ref = x[:, :-3, :]
    assert out.shape == ref.shape
    assert jnp.array_equal(out, ref), "Pallas result does not match reference"

    # Non-128-multiple C (full-C block == full array dim) and a different chomp.
    x2 = jax.random.normal(k1, (2, 16, 64), dtype=jnp.float32)
    out2 = jax.block_until_ready(chomp1d(x2, 5))
    assert jnp.array_equal(out2, x2[:, :-5, :]), "mismatch on non-lane-aligned C"

    # Degenerate small-L_out fallback path (L_out = 4 < 8 sublanes).
    x3 = jax.random.normal(k2, (2, 6, 64), dtype=jnp.float32)
    out3 = jax.block_until_ready(chomp1d(x3, 2))
    assert jnp.array_equal(out3, x3[:, :-2, :]), "mismatch on small-L_out fallback"

    print("KERNEL_OK")
</pallas_src>

<mosaic_0001>
module attributes {stable_mosaic.version = 11 : i64} {
  func.func @_copy_kernel(%arg0: i32, %arg1: i32, %arg2: memref<1x8x128xf32, #tpu.memory_space<vmem>>, %arg3: memref<1x8x128xf32, #tpu.memory_space<vmem>>) attributes {dimension_semantics = [#tpu.dimension_semantics<parallel>, #tpu.dimension_semantics<parallel>], iteration_bounds = array<i64: 2, 2>, scalar_prefetch = 0 : i64, scratch_operands = 0 : i64, tpu.core_type = #tpu.core_type<tc>, window_params = [{transform_indices = @transform_0, window_bounds = array<i64: 1, 8, 128>}, {transform_indices = @transform_1, window_bounds = array<i64: 1, 8, 128>}]} {
    %c0 = arith.constant 0 : index
    %c0_0 = arith.constant 0 : index
    %c0_1 = arith.constant 0 : index
    %0 = vector.load %arg2[%c0, %c0_0, %c0_1] : memref<1x8x128xf32, #tpu.memory_space<vmem>>, vector<1x8x128xf32>
    %c0_2 = arith.constant 0 : index
    %c0_3 = arith.constant 0 : index
    %c0_4 = arith.constant 0 : index
    %1 = vector.load %arg3[%c0_2, %c0_3, %c0_4] : memref<1x8x128xf32, #tpu.memory_space<vmem>>, vector<1x8x128xf32>
    tpu.vector_store %arg3[%c0_2, %c0_3, %c0_4], %0 {strides = array<i32>} : memref<1x8x128xf32, #tpu.memory_space<vmem>>, vector<1x8x128xf32>,
    return
  }
  func.func @transform_0(%arg0: i32, %arg1: i32) -> (i32, i32, i32) {
    %c0_i32 = arith.constant 0 : i32
    %c0_i32_0 = arith.constant 0 : i32
    return %arg0, %arg1, %c0_i32 : i32, i32, i32
  }
  func.func @transform_1(%arg0: i32, %arg1: i32) -> (i32, i32, i32) {
    %c0_i32 = arith.constant 0 : i32
    %c0_i32_0 = arith.constant 0 : i32
    return %arg0, %arg1, %c0_i32 : i32, i32, i32
  }
}

</mosaic_0001>

<llo_original>
// kernel: tpu_custom_call.1
$region0: #{tpu_custom_call.1}
  #allocation0 [shape = 'u32[]', space=smem, size = 0x4, offset = 0x4, fixed_abs, tag = 'smem constant byte address 0x4 - core index']
  #allocation1 [shape = 'u32[144,128]{1,0:T(1,128)}', space=vmem, size = 0x12000, scoped, tag = 'internal scratch']
  %s0 = inlined_call_operand.hbm [shape: f32[2,16,128], index: 0, kind: input, shape index: {}]
  %s1 = inlined_call_operand.vmem [shape: f32[2,13,128], index: 1, kind: output, shape index: {}]
  %s2 = sld [smem:[#allocation0]]
  $region41: #{tpu_custom_call.1} parent=0
    _
  %s4 = ssub.s32 1, %s2
  %s5 = scalar_select 0, %s4, %s2
  $region1: #{tpu_custom_call.1} parent=0
    #allocation2 [shape = 'u8[8192]{0}', space=vmem, size = 0x2000, scoped, tag = 'input window, operand 0']
    #allocation3 [shape = 's32[2]{0}', space=sflag, size = 0x8, scoped, tag = 'scoped memory for tpu_custom_call.1']
    %6 = vsyncpa [#allocation3], 0
    %s7 = scalar_lea.sflag [#allocation3], 1
    %8 = vsyncpa %s7, 0
    loop: start=0, step=1, limit=6
    $region2: #{tpu_custom_call.1} parent=1 // loop_pre_header
      _
    $region3: #{tpu_custom_call.1} parent=1 // loop_header
      %s10 = sphi 0, %s14
      %p11 = scmp.ge.s32.totalorder %s10, 6
      %s17 = sphi 0, %s29
      %s18 = sphi 0, %s25
      %s19 = sphi 0, %s17
      %s20 = sphi 0, %s18
      %s21 = sphi 0, %s19
      %s22 = sphi 0, %s20
      %s34 = sphi 0, %s36
      %s37 = sphi 0, %s34
      %s38 = sphi 0, %s37
      %s54 = sphi 0, %s38
      %s62 = sphi 0, %s64
      %s65 = sphi 0, %s62
      %s66 = sphi 0, %s65
      %s82 = sphi 0, %s66
    $region4: #{tpu_custom_call.1} parent=1 // loop_header_branch
      %13 = sbr.rel (%p11) target = $region8
    $region5: #{tpu_custom_call.1} parent=1 // loop_body
      %s15 = ssub.s32 %s10, 1
      %s16 = ssub.s32 %s10, 2
      %s23 = sadd.s32 1, %s18
      %p24 = scmp.ge.s32.totalorder %s23, 2
      %s25 = scalar_select %p24, 0, %s23
      %s26 = sadd.s32 1, %s17
      %s27 = scalar_select %p24, %s26, %s17
      %p28 = scmp.ge.s32.totalorder %s27, 2
      %s29 = scalar_select %p28, 0, %s27
      %s30 = ssub.s32 %s17, %s29
      %s31 = ssub.s32 %s18, %s25
      %s32 = sor.u32 %s30, %s31
      %p33 = scmp.eq.s32.totalorder %s32, 0
      %s35 = sadd.s32 %s34, 1
      %s36 = scalar_select %p33, %s34, %s35
      %p39 = pneg %p33
      %p40 = scmp.eq.s32.totalorder %s10, 3
      %p41 = por %p39, %p40
      %p42 = scmp.ne.s32.totalorder %s34, %s37
      %p43 = scmp.eq.s32.totalorder %s10, 0
      %p44 = por %p42, %p43
      %p45 = scmp.ne.s32.totalorder %s34, %s37
      %p46 = scmp.eq.s32.totalorder %s15, 3
      %p47 = por %p45, %p46
      %p48 = scmp.ne.s32.totalorder %s37, %s38
      %p49 = scmp.eq.s32.totalorder %s15, 0
      %p50 = por %p48, %p49
      %p51 = scmp.ne.s32.totalorder %s37, %s38
      %p52 = scmp.eq.s32.totalorder %s16, 3
      %p53 = por %p51, %p52
      %p55 = scmp.ne.s32.totalorder %s38, %s54
      %p56 = scmp.eq.s32.totalorder %s16, 0
      %p57 = por %p55, %p56
      %s58 = ssub.s32 %s17, %s29
      %s59 = ssub.s32 %s18, %s25
      %s60 = sor.u32 %s58, %s59
      %p61 = scmp.eq.s32.totalorder %s60, 0
      %s63 = sadd.s32 %s62, 1
      %s64 = scalar_select %p61, %s62, %s63
      %p67 = pneg %p61
      %p68 = scmp.eq.s32.totalorder %s10, 3
      %p69 = por %p67, %p68
      %p70 = scmp.ne.s32.totalorder %s62, %s65
      %p71 = scmp.eq.s32.totalorder %s10, 0
      %p72 = por %p70, %p71
      %p73 = scmp.ne.s32.totalorder %s62, %s65
      %p74 = scmp.eq.s32.totalorder %s15, 3
      %p75 = por %p73, %p74
      %p76 = scmp.ne.s32.totalorder %s65, %s66
      %p77 = scmp.eq.s32.totalorder %s15, 0
      %p78 = por %p76, %p77
      %p79 = scmp.ne.s32.totalorder %s65, %s66
      %p80 = scmp.eq.s32.totalorder %s16, 3
      %p81 = por %p79, %p80
      %p83 = scmp.ne.s32.totalorder %s66, %s82
      %p84 = scmp.eq.s32.totalorder %s16, 0
      %p85 = por %p83, %p84
      %p86 = scmp.le.s32.totalorder 1, %s10
      %p87 = scmp.lt.s32.totalorder %s10, 5
      %p88 = pnand %p86, %p87
      %p89 = pneg %p88
      // Predicated region
      $region9: #{tpu_custom_call.1} parent=5 // pred_check
        _
      $region10: #{tpu_custom_call.1} parent=5 // pred_check_branch
        %91 = sbr.rel (%p88) target = $region12
      $region11: #{tpu_custom_call.1} parent=5 // pred_region
        %s92 = ssub.s32 %s10, 1
      $region12: #{tpu_custom_call.1} parent=5 // pred_fallthru
        _
      %p93 = scmp.lt.s32.totalorder %s10, 4
      // Predicated region
      $region13: #{tpu_custom_call.1} parent=5 // pred_check
        %p94 = pneg %p93
      $region14: #{tpu_custom_call.1} parent=5 // pred_check_branch
        %96 = sbr.rel (%p94) target = $region16
      $region15: #{tpu_custom_call.1} parent=5 // pred_region
        // Predicated region
        $region17: #{tpu_custom_call.1} parent=15 // pred_check
          %p97 = pneg %p44
        $region18: #{tpu_custom_call.1} parent=15 // pred_check_branch
          %99 = sbr.rel (%p97) target = $region20
        $region19: #{tpu_custom_call.1} parent=15 // pred_region
          %s100 = sand.u32 %s34, 1
          %s101 = scalar_lea.sflag [#allocation3], %s100
          %s102 = sand.u32 %s34, 1
          %s103 = smul.addr %s102, 8
          %s104 = scalar_lea.vmem [#allocation2], %s103
          %s106 = ssub.s32 128, 128
          %107 = vsyncadd %s101, %s106
          %s108 = smul.addr %s17, 2
          %s109 = sadd.s32 %s18, %s108
          %s110 = smul.addr %s109, 128
          %s111 = scalar_lea.hbm %s0, %s110
          %s113 = sshll.u32 %s104, 4
          %s114 = int_to_ptr.vmem [resolvable:$true] %s113
          %116 = dma.hbm_to_vmem [thread:$0]  %s111, 128, %s114, %s101
        $region20: #{tpu_custom_call.1} parent=15 // pred_fallthru
          _
      $region16: #{tpu_custom_call.1} parent=5 // pred_fallthru
        _
      %p117 = scmp.le.s32.totalorder 1, %s10
      %p118 = scmp.lt.s32.totalorder %s10, 5
      %p119 = pnand %p117, %p118
      %p120 = pneg %p119
      // Predicated region
      $region21: #{tpu_custom_call.1} parent=5 // pred_check
        _
      $region22: #{tpu_custom_call.1} parent=5 // pred_check_branch
        %122 = sbr.rel (%p119) target = $region24
      $region23: #{tpu_custom_call.1} parent=5 // pred_region
        %s123 = ssub.s32 %s10, 1
        %s124 = sand.u32 %s37, 1
        %s125 = scalar_lea.sflag [#allocation3], %s124
        %s126 = sand.u32 %s37, 1
        %s127 = smul.addr %s126, 8
        %s128 = scalar_lea.vmem [#allocation2], %s127
        // Predicated region
        $region25: #{tpu_custom_call.1} parent=23 // pred_check
          %p129 = pneg %p50
        $region26: #{tpu_custom_call.1} parent=23 // pred_check_branch
          %131 = sbr.rel (%p129) target = $region28
        $region27: #{tpu_custom_call.1} parent=23 // pred_region
          %132 = dma.done %s125, 128
        $region28: #{tpu_custom_call.1} parent=23 // pred_fallthru
          _
        %s133 = sand.u32 %s37, 1
        %s134 = scalar_lea.sflag [#allocation3], %s133
        %s135 = sand.u32 %s37, 1
        %s136 = smul.addr %s135, 8
        %s137 = scalar_lea.vmem [#allocation2], %s136
        %p138 = pneg %p50
        %p139 = pneg %p47
        %p140 = pneg %p78
        %p141 = pneg %p75
        %p142 = scmp.lt.s32.totalorder %s19, 1
        %s143 = scalar_select %p142, %s19, 1
        %p144 = scmp.lt.s32.totalorder %s20, 1
        %s145 = scalar_select %p144, %s20, 1
        %s146 = smul.addr %s143, 2
        %s147 = sadd.s32 %s145, %s146
        %s148 = smul.addr %s147, 8
        %s149 = scalar_lea.vmem %s1, %s148
        %p150 = scmp.lt.s32.totalorder %s19, 1
        %s151 = scalar_select %p150, %s19, 1
        %p152 = scmp.lt.s32.totalorder %s20, 1
        %s153 = scalar_select %p152, %s20, 1
        %s154 = smul.addr %s151, 2
        %s155 = sadd.s32 %s153, %s154
        %s156 = smul.addr %s155, 8
        %s157 = scalar_lea.vmem %s1, %s156
        %v158 = vld [vmem:[%s128] sm:$0xff]
        %159 = vst [vmem:[%s157] sm:$0xff] %v158
        %p160 = scmp.lt.s32.totalorder %s19, 1
        %s161 = scalar_select %p160, %s19, 1
        %p162 = scmp.lt.s32.totalorder %s20, 1
        %s163 = scalar_select %p162, %s20, 1
        %s164 = smul.addr %s161, 2
        %s165 = sadd.s32 %s163, %s164
        %s166 = smul.addr %s165, 8
        %s167 = scalar_lea.vmem %s1, %s166
        // Predicated region
        $region29: #{tpu_custom_call.1} parent=23 // pred_check
          %p168 = pneg %p75
        $region30: #{tpu_custom_call.1} parent=23 // pred_check_branch
          %170 = sbr.rel (%p168) target = $region32
        $region31: #{tpu_custom_call.1} parent=23 // pred_region
          _
        $region32: #{tpu_custom_call.1} parent=23 // pred_fallthru
          _
      $region24: #{tpu_custom_call.1} parent=5 // pred_fallthru
        _
      %p171 = scmp.le.s32.totalorder 2, %s10
      // Predicated region
      $region33: #{tpu_custom_call.1} parent=5 // pred_check
        %p172 = pneg %p171
      $region34: #{tpu_custom_call.1} parent=5 // pred_check_branch
        %174 = sbr.rel (%p172) target = $region36
      $region35: #{tpu_custom_call.1} parent=5 // pred_region
        %s175 = ssub.s32 %s10, 2
        // Predicated region
        $region37: #{tpu_custom_call.1} parent=35 // pred_check
          %p176 = pneg %p81
        $region38: #{tpu_custom_call.1} parent=35 // pred_check_branch
          %178 = sbr.rel (%p176) target = $region40
        $region39: #{tpu_custom_call.1} parent=35 // pred_region
          %p179 = scmp.lt.s32.totalorder %s21, 1
          %s180 = scalar_select %p179, %s21, 1
          %p181 = scmp.lt.s32.totalorder %s22, 1
          %s182 = scalar_select %p181, %s22, 1
          %s183 = smul.addr %s180, 2
          %s184 = sadd.s32 %s182, %s183
          %s185 = smul.addr %s184, 8
          %s186 = scalar_lea.vmem %s1, %s185
        $region40: #{tpu_custom_call.1} parent=35 // pred_fallthru
          _
      $region36: #{tpu_custom_call.1} parent=5 // pred_fallthru
        _
    $region6: #{tpu_custom_call.1} parent=1 // loop_footer
      %s14 = sadd.s32 1, %s10
    $region7: #{tpu_custom_call.1} parent=1 // loop_footer_branch
      %9 = sbr.rel target = $region3
    $region8: #{tpu_custom_call.1} parent=1 // loop_exit
      _
    %187 = vsyncpa [#allocation3], 1
    %s188 = scalar_lea.sflag [#allocation3], 1
    %189 = vsyncpa %s188, 1

</llo_original>
